<compile_context>
chip_gen: v7x
topology: tpu7x:2x2x1
jax: 0.10.0
libtpu: 0.0.40
codegen_flags: <defaults>
</compile_context>

<pallas_src>
import functools

import jax
import jax.numpy as jnp
from jax.experimental import pallas as pl
from jax.experimental.pallas import tpu as pltpu


# ------------------------------- kernels -------------------------------------
def _top1_kernel(dcol_ref, x_ref, out_ref, acc_ref, *, inv_n):
    i = pl.program_id(0)

    @pl.when(i == 0)
    def _():
        acc_ref[...] = jnp.zeros_like(acc_ref)

    x = x_ref[...].astype(jnp.float32)            # (TM, B)
    d = dcol_ref[...].astype(jnp.float32)         # (TM, 1): row's own positive logit[i, i]
    f = jax.nn.sigmoid(x - d) + jax.nn.sigmoid(x * x)
    row = jnp.sum(f, axis=1, keepdims=True)       # (TM, 1) lane reduce
    acc_ref[...] += jnp.sum(row, axis=0, keepdims=True)

    @pl.when(i == pl.num_programs(0) - 1)
    def _():
        out_ref[...] = acc_ref[...] * inv_n


def _top1max_kernel(drow_ref, x_ref, out_ref, acc_ref, *, inv_n):
    i = pl.program_id(0)

    @pl.when(i == 0)
    def _():
        acc_ref[...] = jnp.zeros_like(acc_ref)

    x = x_ref[...].astype(jnp.float32)            # (TM, B)
    d = drow_ref[...].astype(jnp.float32)         # (1, B): column diagonal logit[j, j]
    f = jax.nn.sigmoid(x - d) + jax.nn.sigmoid(x * x)
    # softmax folded into the row reduction (no B x B divide, no softmax temp)
    p = jnp.exp(x - jnp.max(x, axis=1, keepdims=True))
    num = jnp.sum(p * f, axis=1, keepdims=True)   # (TM, 1)
    den = jnp.sum(p, axis=1, keepdims=True)       # (TM, 1)
    acc_ref[...] += jnp.sum(num / den, axis=0, keepdims=True)

    @pl.when(i == pl.num_programs(0) - 1)
    def _():
        out_ref[...] = acc_ref[...] * inv_n


def _bpr_kernel(drow_ref, x_ref, out_ref, acc_ref, *, inv_n):
    i = pl.program_id(0)

    @pl.when(i == 0)
    def _():
        acc_ref[...] = jnp.zeros_like(acc_ref)

    x = x_ref[...].astype(jnp.float32)            # (TM, B)
    d = drow_ref[...].astype(jnp.float32)         # (1, B)
    s = jnp.sum(jax.nn.log_sigmoid(d - x), axis=1, keepdims=True)
    acc_ref[...] += jnp.sum(s, axis=0, keepdims=True)

    @pl.when(i == pl.num_programs(0) - 1)
    def _():
        out_ref[...] = -(acc_ref[...] * inv_n)


def _bprmax_kernel(drow_ref, x_ref, out_ref, acc_ref, *, inv_n):
    i = pl.program_id(0)

    @pl.when(i == 0)
    def _():
        acc_ref[...] = jnp.zeros_like(acc_ref)

    x = x_ref[...].astype(jnp.float32)            # (TM, B)
    d = drow_ref[...].astype(jnp.float32)         # (1, B)
    f = jax.nn.sigmoid(d - x)
    p = jnp.exp(x - jnp.max(x, axis=1, keepdims=True))
    num = jnp.sum(p * f, axis=1, keepdims=True)
    den = jnp.sum(p, axis=1, keepdims=True)
    acc_ref[...] += jnp.sum(num / den, axis=0, keepdims=True)

    @pl.when(i == pl.num_programs(0) - 1)
    def _():
        out_ref[...] = -jnp.log(acc_ref[...] * inv_n)


def _xent_kernel(drow_ref, out_ref, *, inv_b):
    # CrossEntropy only touches the diagonal: kernel input is the (1, B) diag row.
    d = drow_ref[...].astype(jnp.float32)
    out_ref[...] = jnp.sum(-jnp.log(d + 1e-24), axis=1, keepdims=True) * inv_b


# ------------------------------- wrapper --------------------------------------
def _pick_block_rows(B):
    """Largest row-tile (multiple of 8, dividing B) within ~2 MiB of f32 rows."""
    budget_rows = max(8, (2 * 1024 * 1024) // max(1, B * 4))
    for cand in (1024, 512, 256, 128, 64, 32, 16, 8):
        if cand <= budget_rows and B % cand == 0:
            return cand
    return B  # fallback: single whole-matrix block (e.g. B not a multiple of 8)


@functools.partial(jax.jit, static_argnames=("loss_type", "block_rows"))
def loss_function(logit, loss_type="TOP1", block_rows=None):
    """Pallas equivalent of LossFunction(loss_type)(logit); returns a scalar float32."""
    if loss_type not in ("TOP1", "TOP1-max", "BPR", "BPR-max", "CrossEntropy"):
        raise NotImplementedError(loss_type)

    B = logit.shape[0]
    diag = jnp.diagonal(logit)            # (B,), native dtype (no upcast before the kernel)
    inv_n = 1.0 / float(B * B)

    if loss_type == "CrossEntropy":
        out = pl.pallas_call(
            functools.partial(_xent_kernel, inv_b=1.0 / float(B)),
            out_shape=jax.ShapeDtypeStruct((1, 1), jnp.float32),
            in_specs=[pl.BlockSpec(memory_space=pltpu.MemorySpace.VMEM)],
            out_specs=pl.BlockSpec(memory_space=pltpu.MemorySpace.VMEM),
        )(diag.reshape(1, B))
        return out[0, 0]

    # Row-tile size: multiple of 8 dividing B (or the full B as fallback).
    if block_rows is None:
        tm = _pick_block_rows(B)
    else:
        tm = int(block_rows)
        if B % tm != 0 or (tm % 8 != 0 and tm != B):
            tm = B

    grid = (B // tm,)
    x_spec = pl.BlockSpec((tm, B), lambda i: (i, 0))
    out_spec = pl.BlockSpec((1, 1), lambda i: (0, 0))
    scratch = [pltpu.VMEM((1, 1), jnp.float32)]

    if loss_type == "TOP1":
        kernel = functools.partial(_top1_kernel, inv_n=inv_n)
        d_in = diag.reshape(B, 1)                               # row diagonal, tiled with x
        d_spec = pl.BlockSpec((tm, 1), lambda i: (i, 0))
    else:
        d_in = diag.reshape(1, B)                               # column diagonal, resident
        d_spec = pl.BlockSpec((1, B), lambda i: (0, 0))
        if loss_type == "TOP1-max":
            kernel = functools.partial(_top1max_kernel, inv_n=inv_n)
        elif loss_type == "BPR":
            kernel = functools.partial(_bpr_kernel, inv_n=inv_n)
        else:  # "BPR-max"
            kernel = functools.partial(_bprmax_kernel, inv_n=inv_n)

    out = pl.pallas_call(
        kernel,
        out_shape=jax.ShapeDtypeStruct((1, 1), jnp.float32),
        grid_spec=pltpu.PrefetchScalarGridSpec(
            num_scalar_prefetch=0,
            grid=grid,
            in_specs=[d_spec, x_spec],
            out_specs=out_spec,
            scratch_shapes=scratch,
        ),
        compiler_params=pltpu.CompilerParams(
            dimension_semantics=("arbitrary",),
            vmem_limit_bytes=32 * 1024 * 1024,
        ),
    )(d_in, logit)
    return out[0, 0]


# ---------------- pure-JAX references (mirror the PyTorch code exactly) ----------------
def _ref(logit, loss_type):
    x = logit.astype(jnp.float32)
    d = jnp.diag(x)
    if loss_type == "TOP1":
        bpr = jnp.mean(jax.nn.sigmoid(x - d[:, None]), axis=1)
        l2 = jnp.mean(jax.nn.sigmoid(x * x), axis=1)
        return jnp.mean(bpr + l2)
    if loss_type == "TOP1-max":
        sm = jax.nn.softmax(x, axis=1)
        diff = x - d[None, :]
        return jnp.mean(sm * (jax.nn.sigmoid(diff) + jax.nn.sigmoid(x * x)))
    if loss_type == "BPR":
        diff = d[None, :] - x
        return -jnp.mean(jax.nn.log_sigmoid(diff))
    if loss_type == "BPR-max":
        sm = jax.nn.softmax(x, axis=1)
        diff = d[None, :] - x
        return -jnp.log(jnp.mean(sm * jax.nn.sigmoid(diff)))
    if loss_type == "CrossEntropy":
        return jnp.mean(-jnp.log(d + 1e-24))
    raise NotImplementedError(loss_type)


if __name__ == "__main__":
    k0, k1 = jax.random.split(jax.random.PRNGKey(0))

    # logit is the square (B, B) session score matrix (diag = positive-item scores).
    B = 8
    logit = jax.random.uniform(k0, (B, B), dtype=jnp.float32, minval=0.01, maxval=1.0)

    # Default LossFunction uses TOP1; run it and block.
    out = jax.block_until_ready(loss_function(logit, loss_type="TOP1"))

    # Sanity-check all supported loss types against pure-JAX references.
    for lt in ("TOP1", "TOP1-max", "BPR", "BPR-max", "CrossEntropy"):
        got = jax.block_until_ready(loss_function(logit, loss_type=lt))
        want = _ref(logit, lt)
        assert jnp.allclose(got, want, rtol=1e-5, atol=1e-5), (lt, got, want)

    # Exercise the multi-step row-tiled grid + accumulator path (4 blocks of 8 rows).
    B2 = 32
    logit2 = jax.random.uniform(k1, (B2, B2), dtype=jnp.float32, minval=0.01, maxval=1.0)
    for lt in ("TOP1", "TOP1-max", "BPR", "BPR-max"):
        got = jax.block_until_ready(loss_function(logit2, loss_type=lt, block_rows=8))
        want = _ref(logit2, lt)
        assert jnp.allclose(got, want, rtol=1e-5, atol=1e-5), (lt, got, want)

    print("KERNEL_OK")
</pallas_src>

<mosaic_0001>
module attributes {stable_mosaic.version = 11 : i64} {
  func.func @_top1_kernel(%arg0: i32, %arg1: memref<8x1xf32, #tpu.memory_space<vmem>>, %arg2: memref<8x8xf32, #tpu.memory_space<vmem>>, %arg3: memref<1x1xf32, #tpu.memory_space<vmem>>, %arg4: memref<1x1xf32, #tpu.memory_space<vmem>>) attributes {dimension_semantics = [#tpu.dimension_semantics<arbitrary>], iteration_bounds = array<i64: 1>, scalar_prefetch = 0 : i64, scratch_operands = 1 : i64, tpu.core_type = #tpu.core_type<tc>, window_params = [{transform_indices = @transform_0, window_bounds = array<i64: 8, 1>}, {transform_indices = @transform_1, window_bounds = array<i64: 8, 8>}, {pipeline_mode = #tpu.pipeline_mode<synchronous>, transform_indices = @transform_2, window_bounds = array<i64: 1, 1>}]} {
    %c0_i32 = arith.constant 0 : i32
    %0 = arith.cmpi eq, %arg0, %c0_i32 : i32
    %1 = arith.extui %0 : i1 to i32
    %c0_i32_0 = arith.constant 0 : i32
    %2 = arith.cmpi ne, %1, %c0_i32_0 : i32
    scf.if %2 {
      %cst_13 = arith.constant 0.000000e+00 : f32
      %29 = vector.broadcast %cst_13 : f32 to vector<1x1xf32>
      %c0_14 = arith.constant 0 : index
      %c0_15 = arith.constant 0 : index
      %30 = vector.load %arg4[%c0_14, %c0_15] : memref<1x1xf32, #tpu.memory_space<vmem>>, vector<1x1xf32>
      tpu.vector_store %arg4[%c0_14, %c0_15], %29 {strides = array<i32>} : memref<1x1xf32, #tpu.memory_space<vmem>>, vector<1x1xf32>,
    } else {
    }
    %c0 = arith.constant 0 : index
    %c0_1 = arith.constant 0 : index
    %3 = vector.load %arg2[%c0, %c0_1] : memref<8x8xf32, #tpu.memory_space<vmem>>, vector<8x8xf32>
    %c0_2 = arith.constant 0 : index
    %c0_3 = arith.constant 0 : index
    %4 = vector.load %arg1[%c0_2, %c0_3] : memref<8x1xf32, #tpu.memory_space<vmem>>, vector<8x1xf32>
    %5 = vector.broadcast %4 : vector<8x1xf32> to vector<8x8xf32>
    %6 = arith.subf %3, %5 : vector<8x8xf32>
    %7 = arith.negf %6 : vector<8x8xf32>
    %8 = math.exp %7 : vector<8x8xf32>
    %cst = arith.constant 1.000000e+00 : f32
    %9 = vector.broadcast %cst : f32 to vector<8x8xf32>
    %10 = arith.addf %9, %8 : vector<8x8xf32>
    %11 = arith.divf %9, %10 : vector<8x8xf32>
    %12 = arith.mulf %3, %3 : vector<8x8xf32>
    %13 = arith.negf %12 : vector<8x8xf32>
    %14 = math.exp %13 : vector<8x8xf32>
    %cst_4 = arith.constant 1.000000e+00 : f32
    %15 = vector.broadcast %cst_4 : f32 to vector<8x8xf32>
    %16 = arith.addf %15, %14 : vector<8x8xf32>
    %17 = arith.divf %15, %16 : vector<8x8xf32>
    %18 = arith.addf %11, %17 : vector<8x8xf32>
    %cst_5 = arith.constant dense<0.000000e+00> : vector<8xf32>
    %19 = vector.multi_reduction <add>, %18, %cst_5 [1] : vector<8x8xf32> to vector<8xf32>
    %20 = vector.shape_cast %19 : vector<8xf32> to vector<8x1xf32>
    %c0_6 = arith.constant 0 : index
    %c0_7 = arith.constant 0 : index
    %21 = vector.load %arg4[%c0_6, %c0_7] : memref<1x1xf32, #tpu.memory_space<vmem>>, vector<1x1xf32>
    %cst_8 = arith.constant dense<0.000000e+00> : vector<1xf32>
    %22 = vector.multi_reduction <add>, %20, %cst_8 [0] : vector<8x1xf32> to vector<1xf32>
    %23 = vector.shape_cast %22 : vector<1xf32> to vector<1x1xf32>
    %24 = arith.addf %21, %23 : vector<1x1xf32>
    %c0_9 = arith.constant 0 : index
    %c0_10 = arith.constant 0 : index
    %25 = vector.load %arg4[%c0_9, %c0_10] : memref<1x1xf32, #tpu.memory_space<vmem>>, vector<1x1xf32>
    tpu.vector_store %arg4[%c0_9, %c0_10], %24 {strides = array<i32>} : memref<1x1xf32, #tpu.memory_space<vmem>>, vector<1x1xf32>,
    %c0_i32_11 = arith.constant 0 : i32
    %26 = arith.cmpi eq, %arg0, %c0_i32_11 : i32
    %27 = arith.extui %26 : i1 to i32
    %c0_i32_12 = arith.constant 0 : i32
    %28 = arith.cmpi ne, %27, %c0_i32_12 : i32
    scf.if %28 {
      %c0_13 = arith.constant 0 : index
      %c0_14 = arith.constant 0 : index
      %29 = vector.load %arg4[%c0_13, %c0_14] : memref<1x1xf32, #tpu.memory_space<vmem>>, vector<1x1xf32>
      %cst_15 = arith.constant 1.562500e-02 : f32
      %30 = vector.broadcast %cst_15 : f32 to vector<1x1xf32>
      %31 = arith.mulf %29, %30 : vector<1x1xf32>
      %c0_16 = arith.constant 0 : index
      %c0_17 = arith.constant 0 : index
      %32 = vector.load %arg3[%c0_16, %c0_17] : memref<1x1xf32, #tpu.memory_space<vmem>>, vector<1x1xf32>
      tpu.vector_store %arg3[%c0_16, %c0_17], %31 {strides = array<i32>} : memref<1x1xf32, #tpu.memory_space<vmem>>, vector<1x1xf32>,
    } else {
    }
    return
  }
  func.func @transform_0(%arg0: i32) -> (i32, i32) {
    %c0_i32 = arith.constant 0 : i32
    %c0_i32_0 = arith.constant 0 : i32
    return %arg0, %c0_i32 : i32, i32
  }
  func.func @transform_1(%arg0: i32) -> (i32, i32) {
    %c0_i32 = arith.constant 0 : i32
    %c0_i32_0 = arith.constant 0 : i32
    return %arg0, %c0_i32 : i32, i32
  }
  func.func @transform_2(%arg0: i32) -> (i32, i32) {
    %c0_i32 = arith.constant 0 : i32
    %c0_i32_0 = arith.constant 0 : i32
    %c0_i32_1 = arith.constant 0 : i32
    return %c0_i32, %c0_i32_0 : i32, i32
  }
}

</mosaic_0001>

<llo_original>
// kernel: loss_function.1
$region0: #{loss_function.1}
  #allocation0 [shape = 'u32[]', space=smem, size = 0x4, offset = 0x4, fixed_abs, tag = 'smem constant byte address 0x4 - core index']
  #allocation1 [shape = 'u32[144,128]{1,0:T(1,128)}', space=vmem, size = 0x12000, scoped, tag = 'internal scratch']
  #allocation2 [shape = 'f32[1,1]{1,0:T(1,128)}', space=vmem, size = 0x200, scoped, tag = 'scratch operand']
  %s0 = inlined_call_operand.vmem [shape: f32[8,1], index: 0, kind: input, shape index: {}]
  %s1 = inlined_call_operand.vmem [shape: f32[8,8], index: 1, kind: input, shape index: {}]
  %s2 = inlined_call_operand.hbm [shape: f32[1,1], index: 2, kind: output, shape index: {}]
  %s3 = sld [smem:[#allocation0]]
  $region26: #{loss_function.1} parent=0
    _
  %s5 = ssub.s32 1, %s3
  %s6 = scalar_select 0, %s5, %s3
  $region1: #{loss_function.1} parent=0
    #allocation3 [shape = 'u8[512]{0}', space=vmem, size = 0x400, scoped, tag = 'output window, operand 0, single buffered']
    #allocation4 [shape = 's32[1]{0}', space=sflag, size = 0x4, scoped, tag = 'scoped memory for loss_function.1']
    %7 = vsyncpa [#allocation4], 0
    // Predicated region
    $region2: #{loss_function.1} parent=1 // pred_check
      _
    $region3: #{loss_function.1} parent=1 // pred_check_branch
      %9 = sbr.rel (0) target = $region5
    $region4: #{loss_function.1} parent=1 // pred_region
      _
    $region5: #{loss_function.1} parent=1 // pred_fallthru
      _
    // Predicated region
    $region6: #{loss_function.1} parent=1 // pred_check
      _
    $region7: #{loss_function.1} parent=1 // pred_check_branch
      %11 = sbr.rel (0) target = $region9
    $region8: #{loss_function.1} parent=1 // pred_region
      _
    $region9: #{loss_function.1} parent=1 // pred_fallthru
      _
    %p12 = scmp.eq.s32.totalorder 0, 0
    // Predicated region
    $region10: #{loss_function.1} parent=1 // pred_check
      %p13 = pneg %p12
    $region11: #{loss_function.1} parent=1 // pred_check_branch
      %15 = sbr.rel (%p13) target = $region13
    $region12: #{loss_function.1} parent=1 // pred_region
      %vm16 = vcmask 0
      %17 = vst.msk [vmem:[#allocation2] sm:$0x1] %vm16, 0.0
    $region13: #{loss_function.1} parent=1 // pred_fallthru
      _
    %v18 = vld [vmem:[%s1] sm:$0xff]
    %v19 = vld [vmem:[%s0] sm:$0xff]
    %21 = vset.pattern.permute.xlu0 0
    %22 = vperm.xlu0 %21, %v19
    %v23 = vpop.permute.xlu0 %22
    %v25 = vsub.f32 %v18, %v23
    %v26 = vxor.u32 %v25, 2147483648
    %v27 = vmul.f32 %v26, 1.442695
    %v28 = vpow.pop %v27
    %v29 = vadd.f32 %v28, 1.0
    %v30 = vrcp.pop %v29
    %v31 = vmul.f32 1.0, %v30
    %v32 = vmul.f32 %v18, %v18
    %v33 = vxor.u32 %v32, 2147483648
    %v34 = vmul.f32 %v33, 1.442695
    %v35 = vpow.pop %v34
    %v36 = vadd.f32 %v35, 1.0
    %v37 = vrcp.pop %v36
    %v38 = vmul.f32 1.0, %v37
    %v39 = vadd.f32 %v31, %v38
    %vm40 = vcmask 64512
    %v41 = vsel %vm40, %v39, 0.0
    %42 = vadd.xlane.f32.xlu0 %v41
    %v43 = vpop.xlane.xlu0 %42
    %v44 = vld [vmem:[#allocation2] sm:$0x1]
    %v45 = vrot.slane %v43, 4
    %v46 = vadd.f32 %v43, %v45
    %v47 = vrot.slane %v46, 2
    %v48 = vadd.f32 %v46, %v47
    %v49 = vrot.slane %v48, 1
    %v50 = vadd.f32 %v48, %v49
    %v51 = vadd.f32 %v44, %v50
    %vm52 = vcmask 0
    %53 = vst.msk [vmem:[#allocation2] sm:$0x1] %vm52, %v51
    // Predicated region
    $region14: #{loss_function.1} parent=1 // pred_check
      %p54 = pneg %p12
    $region15: #{loss_function.1} parent=1 // pred_check_branch
      %56 = sbr.rel (%p54) target = $region17
    $region16: #{loss_function.1} parent=1 // pred_region
      %v57 = vld [vmem:[#allocation2] sm:$0x1]
      %v58 = vmul.f32 %v57, 0.015625
      %59 = vst.msk [vmem:[#allocation3] sm:$0x1] %vm52, %v58
    $region17: #{loss_function.1} parent=1 // pred_fallthru
      _
    // Predicated region
    $region18: #{loss_function.1} parent=1 // pred_check
      _
    $region19: #{loss_function.1} parent=1 // pred_check_branch
      %61 = sbr.rel (0) target = $region21
    $region20: #{loss_function.1} parent=1 // pred_region
      %s63 = ssub.s32 16, 16
      %64 = vsyncadd [#allocation4], %s63
      %s66 = sshll.u32 [#allocation3], 4
      %s67 = int_to_ptr.vmem [resolvable:$true] %s66
      %69 = dma.vmem_to_hbm [thread:$0]  %s67, 16, %s2, [#allocation4]
    $region21: #{loss_function.1} parent=1 // pred_fallthru
      _
    // Predicated region
    $region22: #{loss_function.1} parent=1 // pred_check
      _
    $region23: #{loss_function.1} parent=1 // pred_check_branch
      %71 = sbr.rel (0) target = $region25
    $region24: #{loss_function.1} parent=1 // pred_region
      %72 = dma.done [#allocation4], 16
    $region25: #{loss_function.1} parent=1 // pred_fallthru
      _
    %73 = vsyncpa [#allocation4], 1

</llo_original>
